<compile_context>
chip_gen: v5e
topology: v5e:2x2
jax: 0.10.0
libtpu: 0.0.40
codegen_flags: <defaults>
</compile_context>

<pallas_src>
import functools
import math

import jax
import jax.numpy as jnp
from jax.experimental import pallas as pl
from jax.experimental.pallas import tpu as pltpu


# VMEM budget used to size the double-buffered input/output blocks.  Chosen
# conservatively for the smallest generation (v7x: 64 MiB physical, ~32 MiB
# scoped default); v5e/v6e have 128 MiB physical.
_VMEM_BLOCK_BUDGET = 32 * 1024 * 1024
_VMEM_LIMIT_BYTES = 48 * 1024 * 1024


def _round_up(x, m):
    return (x + m - 1) // m * m


def _two_tower_kernel(cdd_ref, his_ref, wn_ref, wu_ref, out_ref, *,
                      training: bool, cdd_size: int, his_size: int,
                      hidden_dim: int, tb: int):
    """One batch tile.

    cdd_ref: (C*tb, F)   candidate features, candidate-major within the tile
                         (rows [c*tb:(c+1)*tb] are candidate c for the tile)
    his_ref: (tb, Hs, F) clicked-history news features
    wn_ref / wu_ref: (F, H) encoder projection weights (resident)
    out_ref: (tb, C)     logits
    """
    # encode_user: mean-pool the history axis (one sublane reduction) then a
    # batched MXU projection -> (tb, H).
    user_feat = jnp.sum(his_ref[...], axis=1) * (1.0 / his_size)       # (tb, F)
    user_repr = jnp.dot(user_feat, wu_ref[...],
                        preferred_element_type=jnp.float32)            # (tb, H)

    # encode_news: ONE fused (C*tb, F) @ (F, H) MXU matmul for all candidates
    # of the whole batch tile (weight RHS stays stationary, single MXU push).
    cdd_repr = jnp.dot(cdd_ref[...], wn_ref[...],
                       preferred_element_type=jnp.float32)             # (C*tb, H)

    # compute_score: per-candidate VPU multiply + lane reduction over static,
    # 8-aligned row slices (no transpose, no M=1 matmuls).  The masked
    # column-packing is cheap; VPU is not the binding slot here.
    inv_sqrt_h = 1.0 / math.sqrt(hidden_dim)
    lane_ids = jax.lax.broadcasted_iota(jnp.int32, (1, cdd_size), 1)    # (1, C)
    score = jnp.zeros(out_ref.shape, jnp.float32)                       # (tb, C)
    for c in range(cdd_size):
        repr_c = cdd_repr[c * tb:(c + 1) * tb, :]                       # (tb, H)
        s_c = jnp.sum(repr_c * user_repr, axis=-1, keepdims=True)       # (tb, 1)
        score = score + s_c * (lane_ids == c).astype(jnp.float32)
    score = score * inv_sqrt_h

    if training:
        # log_softmax over the candidate axis.
        m = jnp.max(score, axis=-1, keepdims=True)
        z = score - m
        logits = z - jnp.log(jnp.sum(jnp.exp(z), axis=-1, keepdims=True))
    else:
        logits = jax.nn.sigmoid(score)

    out_ref[...] = logits


def _choose_tile(B, C, Hs, F, block_b, weight_bytes):
    """Pick (padded batch, batch tile) given VMEM budget & megacore needs."""
    b8 = _round_up(max(B, 1), 8)

    itemsize = 4  # float32
    # Double-buffered cdd + his input blocks plus the (tiny) output block.
    bytes_per_row = 2 * itemsize * (C * F + Hs * F) + 2 * itemsize * C
    budget = _VMEM_BLOCK_BUDGET - 2 * weight_bytes  # weights double-buffered
    cap_rows = max(8, budget // max(bytes_per_row, 1))

    target = min(block_b, cap_rows)
    if b8 >= 16:
        # Guarantee >= 2 grid steps so both v7x TensorCores run
        # (dimension_semantics=("parallel",) shards the batch axis).
        target = min(target, b8 // 2)
    target = max(8, target - target % 8)

    # Largest multiple-of-8 divisor of b8 that fits the target (8 always
    # divides b8, so padding beyond the 8-row round-up is never needed).
    tb = 8
    d = 8
    while d <= target:
        if b8 % d == 0:
            tb = d
        d += 8
    return b8, tb


def two_tower_forward(cdd_feat, his_feat, w_news, w_user, training=True,
                      block_b=1024):
    """Pallas implementation of TwoTowerBaseModel.forward.

    Args:
      cdd_feat: [B, cdd_size, feat_dim] candidate news features.
      his_feat: [B, his_size, feat_dim] clicked-history news features.
      w_news, w_user: [feat_dim, hidden_dim] encoder projections (stand-ins
        for the abstract encode_news / encode_user towers).
      training: True -> log_softmax logits, False -> sigmoid logits.
      block_b: max batch-tile size (capped by the VMEM budget).

    Returns:
      (logits [B, cdd_size], kid)
    """
    B, C, F = cdd_feat.shape
    B2, Hs, F2 = his_feat.shape
    assert B == B2 and F == F2
    H = w_news.shape[1]
    assert w_user.shape == (F, H)

    weight_bytes = 2 * 4 * F * H  # both weights, f32
    b8, tb = _choose_tile(B, C, Hs, F, block_b, weight_bytes)
    nt = b8 // tb

    # Pad the batch to a multiple of 8 (at most 7 extra rows; the candidate
    # pad fuses into the re-layout copy below).
    if b8 != B:
        pad = b8 - B
        cdd_feat = jnp.pad(cdd_feat, ((0, pad), (0, 0), (0, 0)))
        his_feat = jnp.pad(his_feat, ((0, pad), (0, 0), (0, 0)))

    # Candidate-major, tile-contiguous 2-D layout: row (i*C*tb + c*tb + t)
    # holds candidate c of batch row (i*tb + t).  This lets the kernel issue
    # a single (C*tb, F) @ (F, H) matmul per grid step and take static
    # contiguous per-candidate slices of the result.
    cdd_2d = (cdd_feat.reshape(nt, tb, C, F)
                      .transpose(0, 2, 1, 3)
                      .reshape(nt * C * tb, F))

    kernel = functools.partial(_two_tower_kernel, training=training,
                               cdd_size=C, his_size=Hs, hidden_dim=H, tb=tb)

    flops = (2 * b8 * C * F * H      # fused candidate projection
             + 2 * b8 * F * H        # user projection
             + 2 * b8 * C * H        # score dot products
             + b8 * Hs * F)          # history mean-pool
    bytes_accessed = 4 * (b8 * C * F + b8 * Hs * F + 2 * F * H + b8 * C)
    cost = pl.CostEstimate(flops=flops, transcendentals=b8 * C,
                           bytes_accessed=bytes_accessed)

    out = pl.pallas_call(
        kernel,
        out_shape=jax.ShapeDtypeStruct((b8, C), jnp.float32),
        grid=(nt,),
        in_specs=[
            pl.BlockSpec((C * tb, F), lambda i: (i, 0)),
            pl.BlockSpec((tb, Hs, F), lambda i: (i, 0, 0)),
            pl.BlockSpec((F, H), lambda i: (0, 0)),
            pl.BlockSpec((F, H), lambda i: (0, 0)),
        ],
        out_specs=pl.BlockSpec((tb, C), lambda i: (i, 0)),
        compiler_params=pltpu.CompilerParams(
            dimension_semantics=("parallel",),
            vmem_limit_bytes=_VMEM_LIMIT_BYTES),
        cost_estimate=cost,
    )(cdd_2d, his_feat, w_news, w_user)

    logits = out[:B]
    # TODO(synk): `kid` comes from subclasses' abstract encode_user; the base
    # class gives it no concrete semantics, so return None here.
    kid = None
    return logits, kid


def _reference_forward(cdd_feat, his_feat, w_news, w_user, training=True):
    hp = jax.lax.Precision.HIGHEST
    cdd_repr = jnp.einsum('bcf,fh->bch', cdd_feat, w_news, precision=hp)
    user_repr = jnp.einsum('bf,fh->bh', his_feat.mean(axis=1), w_user,
                           precision=hp)
    score = jnp.einsum('bch,bh->bc', cdd_repr, user_repr, precision=hp)
    score = score / math.sqrt(w_news.shape[1])
    if training:
        return jax.nn.log_softmax(score, axis=1)
    return jax.nn.sigmoid(score)


if __name__ == "__main__":
    # Small shapes consistent with the module: batch=2, cdd_size=4,
    # his_size=8, feature_dim=32, hidden_dim (bert_dim)=32.
    B, CDD, HIS, FEAT, HID = 2, 4, 8, 32, 32

    key = jax.random.PRNGKey(0)
    k_cdd, k_his, k_wn, k_wu, k_big = jax.random.split(key, 5)

    cdd_feat = jax.random.normal(k_cdd, (B, CDD, FEAT), dtype=jnp.float32)
    his_feat = jax.random.normal(k_his, (B, HIS, FEAT), dtype=jnp.float32)
    w_news = jax.random.normal(k_wn, (FEAT, HID), dtype=jnp.float32) * 0.05
    w_user = jax.random.normal(k_wu, (FEAT, HID), dtype=jnp.float32) * 0.05

    # training=True path (log_softmax), matching a freshly-constructed module.
    logits, kid = two_tower_forward(cdd_feat, his_feat, w_news, w_user,
                                    training=True)
    logits = jax.block_until_ready(logits)
    ref = _reference_forward(cdd_feat, his_feat, w_news, w_user, training=True)
    assert logits.shape == (B, CDD)
    assert jnp.allclose(logits, ref, atol=1e-5, rtol=1e-5), \
        "training-path mismatch vs reference"

    # eval path (sigmoid).
    probs, _ = two_tower_forward(cdd_feat, his_feat, w_news, w_user,
                                 training=False)
    probs = jax.block_until_ready(probs)
    ref_p = _reference_forward(cdd_feat, his_feat, w_news, w_user,
                               training=False)
    assert jnp.allclose(probs, ref_p, atol=1e-5, rtol=1e-5), \
        "eval-path mismatch vs reference"

    # Exercise the multi-tile grid path (>= 2 parallel steps + ragged batch).
    B_big = 20
    k1, k2 = jax.random.split(k_big)
    cdd_big = jax.random.normal(k1, (B_big, CDD, FEAT), dtype=jnp.float32)
    his_big = jax.random.normal(k2, (B_big, HIS, FEAT), dtype=jnp.float32)
    big_logits, _ = two_tower_forward(cdd_big, his_big, w_news, w_user,
                                      training=True, block_b=8)
    big_logits = jax.block_until_ready(big_logits)
    big_ref = _reference_forward(cdd_big, his_big, w_news, w_user,
                                 training=True)
    assert big_logits.shape == (B_big, CDD)
    assert jnp.allclose(big_logits, big_ref, atol=1e-5, rtol=1e-5), \
        "tiled-path mismatch vs reference"

    print("KERNEL_OK")
</pallas_src>

<mosaic_0001>
module attributes {stable_mosaic.version = 11 : i64} {
  func.func @_two_tower_kernel(%arg0: i32, %arg1: memref<32x32xf32, #tpu.memory_space<vmem>>, %arg2: memref<8x8x32xf32, #tpu.memory_space<vmem>>, %arg3: memref<32x32xf32, #tpu.memory_space<vmem>>, %arg4: memref<32x32xf32, #tpu.memory_space<vmem>>, %arg5: memref<8x4xf32, #tpu.memory_space<vmem>>) attributes {dimension_semantics = [#tpu.dimension_semantics<parallel>], iteration_bounds = array<i64: 1>, scalar_prefetch = 0 : i64, scratch_operands = 0 : i64, tpu.core_type = #tpu.core_type<tc>, window_params = [{transform_indices = @transform_0, window_bounds = array<i64: 32, 32>}, {transform_indices = @transform_1, window_bounds = array<i64: 8, 8, 32>}, {pipeline_mode = #tpu.pipeline_mode<synchronous>, transform_indices = @transform_2, window_bounds = array<i64: 32, 32>}, {pipeline_mode = #tpu.pipeline_mode<synchronous>, transform_indices = @transform_3, window_bounds = array<i64: 32, 32>}, {transform_indices = @transform_4, window_bounds = array<i64: 8, 4>}]} {
    %c0 = arith.constant 0 : index
    %c0_0 = arith.constant 0 : index
    %c0_1 = arith.constant 0 : index
    %0 = vector.load %arg2[%c0, %c0_0, %c0_1] : memref<8x8x32xf32, #tpu.memory_space<vmem>>, vector<8x8x32xf32>
    %cst = arith.constant dense<0.000000e+00> : vector<8x32xf32>
    %1 = vector.multi_reduction <add>, %0, %cst [1] : vector<8x8x32xf32> to vector<8x32xf32>
    %cst_2 = arith.constant 1.250000e-01 : f32
    %2 = vector.broadcast %cst_2 : f32 to vector<8x32xf32>
    %3 = arith.mulf %1, %2 : vector<8x32xf32>
    %c0_3 = arith.constant 0 : index
    %c0_4 = arith.constant 0 : index
    %4 = vector.load %arg4[%c0_3, %c0_4] : memref<32x32xf32, #tpu.memory_space<vmem>>, vector<32x32xf32>
    %cst_5 = arith.constant dense<0.000000e+00> : vector<8x32xf32>
    %5 = tpu.matmul %3, %4, %cst_5 {dimension_numbers = #tpu.dot_dimension_numbers<[1], [0], [0], [1], [0, 0, 1, 1], [], []>} : vector<8x32xf32>, vector<32x32xf32>, vector<8x32xf32> -> vector<8x32xf32>
    %c0_6 = arith.constant 0 : index
    %c0_7 = arith.constant 0 : index
    %6 = vector.load %arg1[%c0_6, %c0_7] : memref<32x32xf32, #tpu.memory_space<vmem>>, vector<32x32xf32>
    %c0_8 = arith.constant 0 : index
    %c0_9 = arith.constant 0 : index
    %7 = vector.load %arg3[%c0_8, %c0_9] : memref<32x32xf32, #tpu.memory_space<vmem>>, vector<32x32xf32>
    %cst_10 = arith.constant dense<0.000000e+00> : vector<32x32xf32>
    %8 = tpu.matmul %6, %7, %cst_10 {dimension_numbers = #tpu.dot_dimension_numbers<[1], [0], [0], [1], [0, 0, 1, 1], [], []>} : vector<32x32xf32>, vector<32x32xf32>, vector<32x32xf32> -> vector<32x32xf32>
    %9 = tpu.iota {dimensions = array<i32: 1>} : vector<1x4xi32>
    %cst_11 = arith.constant 0.000000e+00 : f32
    %10 = vector.broadcast %cst_11 : f32 to vector<8x4xf32>
    %11 = vector.extract_strided_slice %8 {offsets = [0, 0], sizes = [8, 32], strides = [1, 1]} : vector<32x32xf32> to vector<8x32xf32>
    %12 = arith.mulf %11, %5 : vector<8x32xf32>
    %cst_12 = arith.constant dense<0.000000e+00> : vector<8xf32>
    %13 = vector.multi_reduction <add>, %12, %cst_12 [1] : vector<8x32xf32> to vector<8xf32>
    %14 = vector.shape_cast %13 : vector<8xf32> to vector<8x1xf32>
    %c0_i32 = arith.constant 0 : i32
    %15 = vector.broadcast %c0_i32 : i32 to vector<1x4xi32>
    %16 = arith.cmpi eq, %9, %15 : vector<1x4xi32>
    %17 = arith.extui %16 : vector<1x4xi1> to vector<1x4xi32>
    %18 = arith.sitofp %17 : vector<1x4xi32> to vector<1x4xf32>
    %19 = vector.broadcast %14 : vector<8x1xf32> to vector<8x4xf32>
    %20 = vector.broadcast %18 : vector<1x4xf32> to vector<8x4xf32>
    %21 = arith.mulf %19, %20 : vector<8x4xf32>
    %22 = arith.addf %10, %21 : vector<8x4xf32>
    %23 = vector.extract_strided_slice %8 {offsets = [8, 0], sizes = [8, 32], strides = [1, 1]} : vector<32x32xf32> to vector<8x32xf32>
    %24 = arith.mulf %23, %5 : vector<8x32xf32>
    %cst_13 = arith.constant dense<0.000000e+00> : vector<8xf32>
    %25 = vector.multi_reduction <add>, %24, %cst_13 [1] : vector<8x32xf32> to vector<8xf32>
    %26 = vector.shape_cast %25 : vector<8xf32> to vector<8x1xf32>
    %c1_i32 = arith.constant 1 : i32
    %27 = vector.broadcast %c1_i32 : i32 to vector<1x4xi32>
    %28 = arith.cmpi eq, %9, %27 : vector<1x4xi32>
    %29 = arith.extui %28 : vector<1x4xi1> to vector<1x4xi32>
    %30 = arith.sitofp %29 : vector<1x4xi32> to vector<1x4xf32>
    %31 = vector.broadcast %26 : vector<8x1xf32> to vector<8x4xf32>
    %32 = vector.broadcast %30 : vector<1x4xf32> to vector<8x4xf32>
    %33 = arith.mulf %31, %32 : vector<8x4xf32>
    %34 = arith.addf %22, %33 : vector<8x4xf32>
    %35 = vector.extract_strided_slice %8 {offsets = [16, 0], sizes = [8, 32], strides = [1, 1]} : vector<32x32xf32> to vector<8x32xf32>
    %36 = arith.mulf %35, %5 : vector<8x32xf32>
    %cst_14 = arith.constant dense<0.000000e+00> : vector<8xf32>
    %37 = vector.multi_reduction <add>, %36, %cst_14 [1] : vector<8x32xf32> to vector<8xf32>
    %38 = vector.shape_cast %37 : vector<8xf32> to vector<8x1xf32>
    %c2_i32 = arith.constant 2 : i32
    %39 = vector.broadcast %c2_i32 : i32 to vector<1x4xi32>
    %40 = arith.cmpi eq, %9, %39 : vector<1x4xi32>
    %41 = arith.extui %40 : vector<1x4xi1> to vector<1x4xi32>
    %42 = arith.sitofp %41 : vector<1x4xi32> to vector<1x4xf32>
    %43 = vector.broadcast %38 : vector<8x1xf32> to vector<8x4xf32>
    %44 = vector.broadcast %42 : vector<1x4xf32> to vector<8x4xf32>
    %45 = arith.mulf %43, %44 : vector<8x4xf32>
    %46 = arith.addf %34, %45 : vector<8x4xf32>
    %47 = vector.extract_strided_slice %8 {offsets = [24, 0], sizes = [8, 32], strides = [1, 1]} : vector<32x32xf32> to vector<8x32xf32>
    %48 = arith.mulf %47, %5 : vector<8x32xf32>
    %cst_15 = arith.constant dense<0.000000e+00> : vector<8xf32>
    %49 = vector.multi_reduction <add>, %48, %cst_15 [1] : vector<8x32xf32> to vector<8xf32>
    %50 = vector.shape_cast %49 : vector<8xf32> to vector<8x1xf32>
    %c3_i32 = arith.constant 3 : i32
    %51 = vector.broadcast %c3_i32 : i32 to vector<1x4xi32>
    %52 = arith.cmpi eq, %9, %51 : vector<1x4xi32>
    %53 = arith.extui %52 : vector<1x4xi1> to vector<1x4xi32>
    %54 = arith.sitofp %53 : vector<1x4xi32> to vector<1x4xf32>
    %55 = vector.broadcast %50 : vector<8x1xf32> to vector<8x4xf32>
    %56 = vector.broadcast %54 : vector<1x4xf32> to vector<8x4xf32>
    %57 = arith.mulf %55, %56 : vector<8x4xf32>
    %58 = arith.addf %46, %57 : vector<8x4xf32>
    %cst_16 = arith.constant 0.176776692 : f32
    %59 = vector.broadcast %cst_16 : f32 to vector<8x4xf32>
    %60 = arith.mulf %58, %59 : vector<8x4xf32>
    %cst_17 = arith.constant dense<0xFF800000> : vector<8xf32>
    %61 = vector.multi_reduction <maximumf>, %60, %cst_17 [1] : vector<8x4xf32> to vector<8xf32>
    %62 = vector.shape_cast %61 : vector<8xf32> to vector<8x1xf32>
    %63 = vector.broadcast %62 : vector<8x1xf32> to vector<8x4xf32>
    %64 = arith.subf %60, %63 : vector<8x4xf32>
    %65 = math.exp %64 : vector<8x4xf32>
    %cst_18 = arith.constant dense<0.000000e+00> : vector<8xf32>
    %66 = vector.multi_reduction <add>, %65, %cst_18 [1] : vector<8x4xf32> to vector<8xf32>
    %67 = vector.shape_cast %66 : vector<8xf32> to vector<8x1xf32>
    %68 = math.log %67 : vector<8x1xf32>
    %69 = vector.broadcast %68 : vector<8x1xf32> to vector<8x4xf32>
    %70 = arith.subf %64, %69 : vector<8x4xf32>
    %c0_19 = arith.constant 0 : index
    %c0_20 = arith.constant 0 : index
    %71 = vector.load %arg5[%c0_19, %c0_20] : memref<8x4xf32, #tpu.memory_space<vmem>>, vector<8x4xf32>
    tpu.vector_store %arg5[%c0_19, %c0_20], %70 {strides = array<i32>} : memref<8x4xf32, #tpu.memory_space<vmem>>, vector<8x4xf32>,
    return
  }
  func.func @transform_0(%arg0: i32) -> (i32, i32) {
    %c0_i32 = arith.constant 0 : i32
    %c0_i32_0 = arith.constant 0 : i32
    return %arg0, %c0_i32 : i32, i32
  }
  func.func @transform_1(%arg0: i32) -> (i32, i32, i32) {
    %c0_i32 = arith.constant 0 : i32
    %c0_i32_0 = arith.constant 0 : i32
    %c0_i32_1 = arith.constant 0 : i32
    return %arg0, %c0_i32, %c0_i32_0 : i32, i32, i32
  }
  func.func @transform_2(%arg0: i32) -> (i32, i32) {
    %c0_i32 = arith.constant 0 : i32
    %c0_i32_0 = arith.constant 0 : i32
    %c0_i32_1 = arith.constant 0 : i32
    return %c0_i32, %c0_i32_0 : i32, i32
  }
  func.func @transform_3(%arg0: i32) -> (i32, i32) {
    %c0_i32 = arith.constant 0 : i32
    %c0_i32_0 = arith.constant 0 : i32
    %c0_i32_1 = arith.constant 0 : i32
    return %c0_i32, %c0_i32_0 : i32, i32
  }
  func.func @transform_4(%arg0: i32) -> (i32, i32) {
    %c0_i32 = arith.constant 0 : i32
    %c0_i32_0 = arith.constant 0 : i32
    return %arg0, %c0_i32 : i32, i32
  }
}

</mosaic_0001>

<llo_original>
// kernel: tpu_custom_call.1
$region0: #{tpu_custom_call.1}
  #allocation0 [shape = 'u32[]', space=smem, size = 0x4, offset = 0x4, fixed_abs, tag = 'smem constant byte address 0x4 - core index']
  #allocation1 [shape = 'u32[72,128]{1,0:T(1,128)}', space=vmem, size = 0x9000, scoped, tag = 'internal scratch']
  %s0 = inlined_call_operand.hbm [shape: f32[32,32], index: 0, kind: input, shape index: {}]
  %s1 = inlined_call_operand.hbm [shape: f32[8,8,32], index: 1, kind: input, shape index: {}]
  %s2 = inlined_call_operand.hbm [shape: f32[32,32], index: 2, kind: input, shape index: {}]
  %s3 = inlined_call_operand.hbm [shape: f32[32,32], index: 3, kind: input, shape index: {}]
  %s4 = inlined_call_operand.vmem [shape: f32[8,4], index: 4, kind: output, shape index: {}]
  %s5 = sld [smem:[#allocation0]]
  $region42: #{tpu_custom_call.1} parent=0
    _
  %s7 = ssub.s32 1, %s5
  %s8 = scalar_select 0, %s7, %s5
  $region1: #{tpu_custom_call.1} parent=0
    #allocation2 [shape = 'u8[16384]{0}', space=vmem, size = 0x4000, scoped, tag = 'input window, operand 0, single buffered']
    #allocation3 [shape = 's32[1]{0}', space=sflag, size = 0x4, scoped, tag = 'scoped memory for tpu_custom_call.1']
    #allocation4 [shape = 'u8[32768]{0}', space=vmem, size = 0x8000, scoped, tag = 'input window, operand 1, single buffered']
    #allocation5 [shape = 's32[1]{0}', space=sflag, size = 0x4, scoped, tag = 'scoped memory for tpu_custom_call.1']
    #allocation6 [shape = 'u8[16384]{0}', space=vmem, size = 0x4000, scoped, tag = 'input window, operand 2, single buffered']
    #allocation7 [shape = 'u8[16384]{0}', space=vmem, size = 0x4000, scoped, tag = 'input window, operand 3, single buffered']
    #allocation8 [shape = 's32[1]{0}', space=sflag, size = 0x4, scoped, tag = 'scoped memory for tpu_custom_call.1']
    %9 = vsyncpa [#allocation3], 0
    %10 = vsyncpa [#allocation5], 0
    %11 = vsyncpa [#allocation8], 0
    // Predicated region
    $region2: #{tpu_custom_call.1} parent=1 // pred_check
      _
    $region3: #{tpu_custom_call.1} parent=1 // pred_check_branch
      %13 = sbr.rel (0) target = $region5
    $region4: #{tpu_custom_call.1} parent=1 // pred_region
      %15 = vsyncadd [#allocation3], 0
      %s16 = sshll.u32 %s0, 4
      %s17 = int_to_ptr.hbm [resolvable:$true] %s16
      %s18 = sshll.u32 [#allocation2], 4
      %s19 = int_to_ptr.vmem [resolvable:$true] %s18
      %24 = dma.hbm_to_vmem [thread:$0]  %s17, 512, %s19, [#allocation3], 128, 128, 8
    $region5: #{tpu_custom_call.1} parent=1 // pred_fallthru
      _
    // Predicated region
    $region6: #{tpu_custom_call.1} parent=1 // pred_check
      _
    $region7: #{tpu_custom_call.1} parent=1 // pred_check_branch
      %26 = sbr.rel (0) target = $region9
    $region8: #{tpu_custom_call.1} parent=1 // pred_region
      %28 = vsyncadd [#allocation5], 0
      %s29 = sshll.u32 %s1, 4
      %s30 = int_to_ptr.hbm [resolvable:$true] %s29
      %s31 = sshll.u32 [#allocation4], 4
      %s32 = int_to_ptr.vmem [resolvable:$true] %s31
      %37 = dma.hbm_to_vmem [thread:$0]  %s30, 1024, %s32, [#allocation5], 128, 128, 8
    $region9: #{tpu_custom_call.1} parent=1 // pred_fallthru
      _
    // Predicated region
    $region10: #{tpu_custom_call.1} parent=1 // pred_check
      _
    $region11: #{tpu_custom_call.1} parent=1 // pred_check_branch
      %39 = sbr.rel (0) target = $region13
    $region12: #{tpu_custom_call.1} parent=1 // pred_region
      %41 = vsyncadd [#allocation5], 0
      %s42 = sshll.u32 %s2, 4
      %s43 = int_to_ptr.hbm [resolvable:$true] %s42
      %s44 = sshll.u32 [#allocation6], 4
      %s45 = int_to_ptr.vmem [resolvable:$true] %s44
      %50 = dma.hbm_to_vmem [thread:$0]  %s43, 512, %s45, [#allocation5], 128, 128, 8
    $region13: #{tpu_custom_call.1} parent=1 // pred_fallthru
      _
    // Predicated region
    $region14: #{tpu_custom_call.1} parent=1 // pred_check
      _
    $region15: #{tpu_custom_call.1} parent=1 // pred_check_branch
      %52 = sbr.rel (0) target = $region17
    $region16: #{tpu_custom_call.1} parent=1 // pred_region
      %54 = vsyncadd [#allocation8], 0
      %s55 = sshll.u32 %s3, 4
      %s56 = int_to_ptr.hbm [resolvable:$true] %s55
      %s57 = sshll.u32 [#allocation7], 4
      %s58 = int_to_ptr.vmem [resolvable:$true] %s57
      %63 = dma.hbm_to_vmem [thread:$0]  %s56, 512, %s58, [#allocation8], 128, 128, 8
    $region17: #{tpu_custom_call.1} parent=1 // pred_fallthru
      _
    // Predicated region
    $region18: #{tpu_custom_call.1} parent=1 // pred_check
      _
    $region19: #{tpu_custom_call.1} parent=1 // pred_check_branch
      %65 = sbr.rel (0) target = $region21
    $region20: #{tpu_custom_call.1} parent=1 // pred_region
      %67 = dma.done [#allocation3], 512
    $region21: #{tpu_custom_call.1} parent=1 // pred_fallthru
      _
    // Predicated region
    $region22: #{tpu_custom_call.1} parent=1 // pred_check
      _
    $region23: #{tpu_custom_call.1} parent=1 // pred_check_branch
      %69 = sbr.rel (0) target = $region25
    $region24: #{tpu_custom_call.1} parent=1 // pred_region
      %71 = dma.done [#allocation5], 1024
    $region25: #{tpu_custom_call.1} parent=1 // pred_fallthru
      _
    // Predicated region
    $region26: #{tpu_custom_call.1} parent=1 // pred_check
      _
    $region27: #{tpu_custom_call.1} parent=1 // pred_check_branch
      %73 = sbr.rel (0) target = $region29
    $region28: #{tpu_custom_call.1} parent=1 // pred_region
      %75 = dma.done [#allocation5], 512
    $region29: #{tpu_custom_call.1} parent=1 // pred_fallthru
      _
    // Predicated region
    $region30: #{tpu_custom_call.1} parent=1 // pred_check
      _
    $region31: #{tpu_custom_call.1} parent=1 // pred_check_branch
      %77 = sbr.rel (0) target = $region33
    $region32: #{tpu_custom_call.1} parent=1 // pred_region
      %79 = dma.done [#allocation8], 512
    $region33: #{tpu_custom_call.1} parent=1 // pred_fallthru
      _
    %v80 = vld [vmem:[#allocation4] sm:$0xff]
    %v81 = vld [vmem:[#allocation4 + $0x8] sm:$0xff]
    %v82 = vld [vmem:[#allocation4 + $0x10] sm:$0xff]
    %v83 = vld [vmem:[#allocation4 + $0x18] sm:$0xff]
    %v84 = vld [vmem:[#allocation4 + $0x20] sm:$0xff]
    %v85 = vld [vmem:[#allocation4 + $0x28] sm:$0xff]
    %v86 = vld [vmem:[#allocation4 + $0x30] sm:$0xff]
    %v87 = vld [vmem:[#allocation4 + $0x38] sm:$0xff]
    %vm88 = vcmask 261120
    %v89 = vsel %vm88, %v80, 0.0
    %v90 = vrot.slane %v89, 4
    %v91 = vadd.f32 %v89, %v90
    %v92 = vrot.slane %v91, 2
    %v93 = vadd.f32 %v91, %v92
    %v94 = vrot.slane %v93, 1
    %v95 = vadd.f32 %v93, %v94
    %v96 = vsel %vm88, %v81, 0.0
    %v97 = vrot.slane %v96, 4
    %v98 = vadd.f32 %v96, %v97
    %v99 = vrot.slane %v98, 2
    %v100 = vadd.f32 %v98, %v99
    %v101 = vrot.slane %v100, 1
    %v102 = vadd.f32 %v100, %v101
    %v103 = vsel %vm88, %v82, 0.0
    %v104 = vrot.slane %v103, 4
    %v105 = vadd.f32 %v103, %v104
    %v106 = vrot.slane %v105, 2
    %v107 = vadd.f32 %v105, %v106
    %v108 = vrot.slane %v107, 1
    %v109 = vadd.f32 %v107, %v108
    %v110 = vsel %vm88, %v83, 0.0
    %v111 = vrot.slane %v110, 4
    %v112 = vadd.f32 %v110, %v111
    %v113 = vrot.slane %v112, 2
    %v114 = vadd.f32 %v112, %v113
    %v115 = vrot.slane %v114, 1
    %v116 = vadd.f32 %v114, %v115
    %v117 = vsel %vm88, %v84, 0.0
    %v118 = vrot.slane %v117, 4
    %v119 = vadd.f32 %v117, %v118
    %v120 = vrot.slane %v119, 2
    %v121 = vadd.f32 %v119, %v120
    %v122 = vrot.slane %v121, 1
    %v123 = vadd.f32 %v121, %v122
    %v124 = vsel %vm88, %v85, 0.0
    %v125 = vrot.slane %v124, 4
    %v126 = vadd.f32 %v124, %v125
    %v127 = vrot.slane %v126, 2
    %v128 = vadd.f32 %v126, %v127
    %v129 = vrot.slane %v128, 1
    %v130 = vadd.f32 %v128, %v129
    %v131 = vsel %vm88, %v86, 0.0
    %v132 = vrot.slane %v131, 4
    %v133 = vadd.f32 %v131, %v132
    %v134 = vrot.slane %v133, 2
    %v135 = vadd.f32 %v133, %v134
    %v136 = vrot.slane %v135, 1
    %v137 = vadd.f32 %v135, %v136
    %v138 = vsel %vm88, %v87, 0.0
    %v139 = vrot.slane %v138, 4
    %v140 = vadd.f32 %v138, %v139
    %v141 = vrot.slane %v140, 2
    %v142 = vadd.f32 %v140, %v141
    %v143 = vrot.slane %v142, 1
    %v144 = vadd.f32 %v142, %v143
    %v145 = vmul.f32 %v95, 0.125
    %v146 = vmul.f32 %v102, 0.125
    %v147 = vmul.f32 %v109, 0.125
    %v148 = vmul.f32 %v116, 0.125
    %v149 = vmul.f32 %v123, 0.125
    %v150 = vmul.f32 %v130, 0.125
    %v151 = vmul.f32 %v137, 0.125
    %v152 = vmul.f32 %v144, 0.125
    %v153 = vld [vmem:[#allocation7] sm:$0xff]
    %v154 = vld [vmem:[#allocation7 + $0x8] sm:$0xff]
    %v155 = vld [vmem:[#allocation7 + $0x10] sm:$0xff]
    %v156 = vld [vmem:[#allocation7 + $0x18] sm:$0xff]
    %vm165 = vcmask 1041409
    %v166 = vsel %vm165, %v146, %v145
    %vm167 = vcmask 1042434
    %v168 = vsel %vm167, %v147, %v166
    %vm169 = vcmask 1043459
    %v170 = vsel %vm169, %v148, %v168
    %vm171 = vcmask 1044484
    %v172 = vsel %vm171, %v149, %v170
    %vm173 = vcmask 1045509
    %v174 = vsel %vm173, %v150, %v172
    %vm175 = vcmask 1046534
    %v176 = vsel %vm175, %v151, %v174
    %vm177 = vcmask 1047559
    %v178 = vsel %vm177, %v152, %v176
    %v179 = vsel %vm88, %v178, 0
    %181 = vmatpush.msra.mxu0 0.0
    %182 = vmatpush.msra.mxu0 0.0
    %183 = vmatpush.msra.mxu0 0.0
    %184 = vmatpush.msra.mxu0 0.0
    %185 = vmatpush.msra.mxu0 0.0
    %186 = vmatpush.msra.mxu0 0.0
    %187 = vmatpush.msra.mxu0 0.0
    %188 = vmatpush.msra.mxu0 0.0
    %189 = vmatpush.msra.mxu0 0.0
    %190 = vmatpush.msra.mxu0 0.0
    %191 = vmatpush.msra.mxu0 0.0
    %192 = vmatpush.msra.mxu0 0.0
    %193 = vmatpush.msra.mxu0 %v156
    %194 = vmatpush.msra.mxu0 %v155
    %195 = vmatpush.msra.mxu0 %v154
    %196 = vmatpush.msra.mxu0 %v153
    %197 = vmatmul.f32.gmra.mxu0 %v179
    %v198 = vpop.f32.mrf.mxu0
    %v199 = vadd.f32 0.0, %v198
    %200 = vdwg.mxu0
    %v201 = vld [vmem:[#allocation2] sm:$0xff]
    %v202 = vld [vmem:[#allocation2 + $0x8] sm:$0xff]
    %v203 = vld [vmem:[#allocation2 + $0x10] sm:$0xff]
    %v204 = vld [vmem:[#allocation2 + $0x18] sm:$0xff]
    %v205 = vld [vmem:[#allocation6] sm:$0xff]
    %v206 = vld [vmem:[#allocation6 + $0x8] sm:$0xff]
    %v207 = vld [vmem:[#allocation6 + $0x10] sm:$0xff]
    %v208 = vld [vmem:[#allocation6 + $0x18] sm:$0xff]
    %v210 = vsel %vm88, %v201, 0
    %v213 = vsel %vm88, %v202, 0
    %v216 = vsel %vm88, %v203, 0
    %v219 = vsel %vm88, %v204, 0
    %221 = vmatpush.msra.mxu0 0.0
    %222 = vmatpush.msra.mxu0 0.0
    %223 = vmatpush.msra.mxu0 0.0
    %224 = vmatpush.msra.mxu0 0.0
    %225 = vmatpush.msra.mxu0 0.0
    %226 = vmatpush.msra.mxu0 0.0
    %227 = vmatpush.msra.mxu0 0.0
    %228 = vmatpush.msra.mxu0 0.0
    %229 = vmatpush.msra.mxu0 0.0
    %230 = vmatpush.msra.mxu0 0.0
    %231 = vmatpush.msra.mxu0 0.0
    %232 = vmatpush.msra.mxu0 0.0
    %233 = vmatpush.msra.mxu0 %v208
    %234 = vmatpush.msra.mxu0 %v207
    %235 = vmatpush.msra.mxu0 %v206
    %236 = vmatpush.msra.mxu0 %v205
    %237 = vmatmul.f32.gmra.mxu0 %v210
    %v238 = vpop.f32.mrf.mxu0
    %v239 = vadd.f32 0.0, %v238
    %240 = vmatmul.f32.gmra.mxu0 %v213
    %v241 = vpop.f32.mrf.mxu0
    %v242 = vadd.f32 0.0, %v241
    %243 = vmatmul.f32.gmra.mxu0 %v216
    %v244 = vpop.f32.mrf.mxu0
    %v245 = vadd.f32 0.0, %v244
    %246 = vmatmul.f32.gmra.mxu0 %v219
    %v247 = vpop.f32.mrf.mxu0
    %v248 = vadd.f32 0.0, %v247
    %249 = vdwg.mxu0
    %v250 = vlaneseq
    %v251 = vand.u32 %v250, 127
    %v252 = vmul.f32 %v239, %v199
    %v253 = vsel %vm88, %v252, 0.0
    %254 = vadd.xlane.f32.xlu0 %v253
    %v255 = vpop.xlane.xlu0 %254
    %vm256 = vcmp.eq.s32.totalorder %v251, 0
    %v257 = vsel %vm256, 1, 0
    %v258 = vcvt.s32.f32 %v257
    %v259 = vmul.f32 %v255, %v258
    %v260 = vadd.f32 %v259, 0.0
    %v261 = vmul.f32 %v242, %v199
    %v262 = vsel %vm88, %v261, 0.0
    %263 = vadd.xlane.f32.xlu0 %v262
    %v264 = vpop.xlane.xlu0 %263
    %vm265 = vcmp.eq.s32.totalorder %v251, 1
    %v266 = vsel %vm265, 1, 0
    %v267 = vcvt.s32.f32 %v266
    %v268 = vmul.f32 %v264, %v267
    %v269 = vadd.f32 %v260, %v268
    %v270 = vmul.f32 %v245, %v199
    %v271 = vsel %vm88, %v270, 0.0
    %272 = vadd.xlane.f32.xlu0 %v271
    %v273 = vpop.xlane.xlu0 %272
    %vm274 = vcmp.eq.s32.totalorder %v251, 2
    %v275 = vsel %vm274, 1, 0
    %v276 = vcvt.s32.f32 %v275
    %v277 = vmul.f32 %v273, %v276
    %v278 = vadd.f32 %v269, %v277
    %v279 = vmul.f32 %v248, %v199
    %v280 = vsel %vm88, %v279, 0.0
    %281 = vadd.xlane.f32.xlu0 %v280
    %v282 = vpop.xlane.xlu0 %281
    %vm283 = vcmp.eq.s32.totalorder %v251, 3
    %v284 = vsel %vm283, 1, 0
    %v285 = vcvt.s32.f32 %v284
    %v286 = vmul.f32 %v282, %v285
    %v287 = vadd.f32 %v278, %v286
    %v288 = vmul.f32 %v287, 0.17677669
    %vm289 = vcmask 31744
    %v290 = vsel %vm289, %v288, -inf
    %291 = vmax.xlane.f32.xlu0 %v290
    %v292 = vpop.xlane.xlu0 %291
    %v293 = vsub.f32 %v288, %v292
    %v294 = vmul.f32 %v293, 1.442695
    %v295 = vpow.pop %v294
    %v296 = vsel %vm289, %v295, 0.0
    %297 = vadd.xlane.f32.xlu0 %v296
    %v298 = vpop.xlane.xlu0 %297
    %v299 = vlog2.pop %v298
    %v300 = vmul.f32 %v299, 0.6931472
    %v301 = vsub.f32 %v293, %v300
    %302 = vst.msk [vmem:[%s4] sm:$0xff] %vm289, %v301
    // Predicated region
    $region34: #{tpu_custom_call.1} parent=1 // pred_check
      _
    $region35: #{tpu_custom_call.1} parent=1 // pred_check_branch
      %304 = sbr.rel (0) target = $region37
    $region36: #{tpu_custom_call.1} parent=1 // pred_region
      _
    $region37: #{tpu_custom_call.1} parent=1 // pred_fallthru
      _
    // Predicated region
    $region38: #{tpu_custom_call.1} parent=1 // pred_check
      _
    $region39: #{tpu_custom_call.1} parent=1 // pred_check_branch
      %306 = sbr.rel (0) target = $region41
    $region40: #{tpu_custom_call.1} parent=1 // pred_region
      _
    $region41: #{tpu_custom_call.1} parent=1 // pred_fallthru
      _
    %307 = vsyncpa [#allocation3], 1
    %308 = vsyncpa [#allocation5], 1
    %309 = vsyncpa [#allocation8], 1

</llo_original>
